<compile_context>
chip_gen: v7x
topology: tpu7x:2x2x1
jax: 0.10.0
libtpu: 0.0.40
codegen_flags: <defaults>
</compile_context>

<pallas_src>
import functools
import math

import jax
import jax.numpy as jnp
import numpy as np
from jax.experimental import pallas as pl
from jax.experimental.pallas import tpu as pltpu


def pointer_kernel(x_ref, sel_ref, selT_ref, W_ref, av_ref, f1w_ref, f1b_ref,
                   f2w_ref, f2b_ref, pv_ref, out_ref, *, compute_dtype):
    # x_ref   : (H, L)   folded hidden states, lane l = local_batch*S + s
    # sel_ref : (L, BB)  0/1 segment selector   (hoisted, resident in VMEM)
    # selT_ref: (BB, L)  its transpose          (hoisted, resident in VMEM)
    # W_ref   : (H, H)   encoder-attention W    av_ref: (1, H) attention v
    # f1w/f1b : (H, H)/(H, 1) fc1               f2w/f2b: (H, H)/(H, 1) fc2
    # pv_ref  : (1, H)   pointer v
    # out_ref : (1, L)   probs (lane-dense)
    x = x_ref[...]                                               # (H, L) f32
    sel = sel_ref[...]                                           # (L, BB) f32
    selT = selT_ref[...]                                         # (BB, L) f32

    def mxu(a, b):
        # Weight matmuls; bf16 operands on v6e/v7x when requested, f32 acc.
        return jnp.dot(a.astype(compute_dtype), b.astype(compute_dtype),
                       preferred_element_type=jnp.float32)

    def f32dot(a, b):
        return jnp.dot(a, b, preferred_element_type=jnp.float32)

    # ---- attention: softmax_s( v @ tanh(W @ x) ) per batch segment ----
    t = jnp.tanh(mxu(W_ref[...], x).astype(compute_dtype))      # (H, L)
    scores = mxu(av_ref[...], t)                                 # (1, L) f32
    # Block-global max shift: exact (softmax is invariant to a per-segment
    # uniform shift) and numerically safe here because |scores| <= ||av||_1
    # (tanh-bounded).  seg_sum is clamped as a cheap guard against a fully
    # underflowed (degenerate) segment producing Inf/NaN.
    m = jnp.max(scores, axis=-1, keepdims=True)                  # (1, 1)
    e = jnp.exp(scores - m)                                      # (1, L) f32
    seg_sum = jnp.maximum(f32dot(e, sel), 1e-30)                 # (1, BB)
    inv = pl.reciprocal(seg_sum, approx=True)                    # EUP slot
    inv = inv * (2.0 - seg_sum * inv)                            # Newton -> f32
    context = f32dot(x * e, sel) * inv                           # (H, BB)

    # ---- two ReLU FC layers, batched over the BB segment columns ----
    h1 = jnp.maximum(mxu(f1w_ref[...], context) + f1b_ref[...], 0.0)  # (H, BB)
    h2 = jnp.maximum(mxu(f2w_ref[...], h1) + f2b_ref[...], 0.0)       # (H, BB)

    # ---- probs = v @ tanh(x + broadcast(h2)) ----
    # x_ref is re-read here (instead of keeping the (H, L) f32 value live
    # across the whole body) to shorten its vreg live range at large L.
    y = jnp.tanh((x_ref[...] + f32dot(h2, selT)).astype(compute_dtype))  # (H, L)
    out_ref[...] = mxu(pv_ref[...], y)                           # (1, L)


def _tpu_topology():
    """Best-effort (physical VMEM bytes per core, TensorCores per chip)."""
    try:
        kind = jax.devices()[0].device_kind.lower()
    except Exception:
        kind = ""
    if "v7" in kind or "7x" in kind:
        return 64 * 1024 * 1024, 2          # v7x: 64 MiB VMEM, 2 TCs
    return 128 * 1024 * 1024, 1             # v5e / v6e: 128 MiB VMEM, 1 TC


def _plan_tiles(B, H, S, itemsize):
    """Pick (BB, n_steps, vmem_limit_bytes):
       * lane width L = BB*S is a multiple of 128 (lane-dense, unmasked stores)
       * per-step VMEM footprint fits a per-generation budget
       * on 2-TC chips the grid has >= 2 parallel steps (both cores busy);
         on 1-TC chips prefer the fewest, largest steps."""
    physical_vmem, num_tc = _tpu_topology()
    budget = physical_vmem // 3             # headroom for compiler scratch/spills

    bb_unit = 128 // math.gcd(S, 128)       # smallest BB giving 128-aligned L

    def footprint(bb):
        L = bb * S
        x_bytes = 2 * H * L * itemsize              # double-buffered x stream
        out_bytes = 2 * L * 4
        sel_bytes = 2 * 2 * L * bb * 4              # sel + selT, 2 buffers each
        w_bytes = 2 * (3 * H * H + 4 * H) * itemsize
        tmp_bytes = 4 * H * L * 4                   # t / x*e / y / h2@selT temps
        return x_bytes + out_bytes + sel_bytes + w_bytes + tmp_bytes

    bb_cap = bb_unit
    while ((bb_cap + bb_unit) * S <= 4096
           and footprint(bb_cap + bb_unit) <= budget):
        bb_cap += bb_unit

    min_steps = 2 if num_tc >= 2 else 1
    n_steps = max(min_steps, -(-B // bb_cap))                       # ceil div
    bb = min(bb_cap, -(-B // (n_steps * bb_unit)) * bb_unit)
    n_steps = max(min_steps, -(-B // bb))

    fp = footprint(bb)
    vmem_limit = None
    if fp > 12 * 1024 * 1024:               # above v5e's 16 MiB scoped default
        vmem_limit = min(2 * fp + (4 << 20), int(physical_vmem * 0.9))
    return bb, n_steps, vmem_limit


def pointer_forward(all_hidden, params, *, compute_dtype=jnp.float32):
    """all_hidden: (B, H, S) float32 -> probs: (B, S) float32."""
    B, H, S = all_hidden.shape
    W, av, f1w, f1b, f2w, f2b, pv = params

    itemsize = jnp.dtype(all_hidden.dtype).itemsize
    BB, n_steps, vmem_limit = _plan_tiles(B, H, S, itemsize)
    B_pad = BB * n_steps
    L = BB * S

    # Fold batch into lanes: (B, H, S) -> (H, B*S), then pad whole fake batch
    # segments so the lane width is 128-aligned (padding is sliced away below;
    # each real segment stays intact so the result is exact).
    # TODO(synk): emitting the (H, B, S) layout from the upstream producer
    # would remove this standalone XLA transpose (an extra HBM read+write).
    x_folded = jnp.transpose(all_hidden, (1, 0, 2)).reshape(H, B * S)
    if B_pad > B:
        x_folded = jnp.pad(x_folded, ((0, 0), (0, (B_pad - B) * S)))

    # Hoisted 0/1 segment selectors: identical for every grid step (lane l of a
    # block belongs to local segment l // S), so they are built once here and
    # kept resident in VMEM via constant index_maps.
    lane = np.arange(L, dtype=np.int64)
    sel_np = (lane[:, None] // S == np.arange(BB)[None, :]).astype(np.float32)
    sel = jnp.asarray(sel_np)                             # (L, BB)
    selT = jnp.asarray(np.ascontiguousarray(sel_np.T))    # (BB, L)

    if compute_dtype != jnp.float32:
        # Pre-cast weights once in the wrapper (in-kernel casts become no-ops,
        # resident weight VMEM halves).  Biases stay f32 (added to f32 acc).
        W, av, f1w, f2w, pv = (p.astype(compute_dtype)
                               for p in (W, av, f1w, f2w, pv))

    kernel = functools.partial(pointer_kernel, compute_dtype=compute_dtype)

    cp_kwargs = dict(dimension_semantics=("parallel",))   # megacore split (v7x)
    if vmem_limit is not None:
        cp_kwargs["vmem_limit_bytes"] = int(vmem_limit)

    # TODO(synk): resident (constant index_map) operands are still
    # double-buffered by the pipeliner; pipeline_mode=pl.Buffered(1) on them
    # would reclaim that VMEM at large H once verified on the target jax build.
    out = pl.pallas_call(
        kernel,
        out_shape=jax.ShapeDtypeStruct((1, B_pad * S), jnp.float32),
        grid=(n_steps,),
        in_specs=[
            pl.BlockSpec((H, L), lambda i: (0, i)),    # folded activations
            pl.BlockSpec((L, BB), lambda i: (0, 0)),   # sel          (resident)
            pl.BlockSpec((BB, L), lambda i: (0, 0)),   # selT         (resident)
            pl.BlockSpec((H, H), lambda i: (0, 0)),    # attention W  (resident)
            pl.BlockSpec((1, H), lambda i: (0, 0)),    # attention v  (resident)
            pl.BlockSpec((H, H), lambda i: (0, 0)),    # fc1 weight   (resident)
            pl.BlockSpec((H, 1), lambda i: (0, 0)),    # fc1 bias col (resident)
            pl.BlockSpec((H, H), lambda i: (0, 0)),    # fc2 weight   (resident)
            pl.BlockSpec((H, 1), lambda i: (0, 0)),    # fc2 bias col (resident)
            pl.BlockSpec((1, H), lambda i: (0, 0)),    # pointer v    (resident)
        ],
        out_specs=pl.BlockSpec((1, L), lambda i: (0, i)),   # lane-dense store
        compiler_params=pltpu.CompilerParams(**cp_kwargs),
    )(x_folded, sel, selT, W, av, f1w, f1b, f2w, f2b, pv)

    return out[0, :B * S].reshape(B, S)


def pointer_reference(all_hidden, params):
    """Pure-JAX reference mirroring the PyTorch forward."""
    W, av, f1w, f1b, f2w, f2b, pv = params
    x = all_hidden                                           # (B, H, S)
    t = jnp.tanh(jnp.einsum('hk,bks->bhs', W, x))
    scores = jnp.einsum('oh,bhs->bos', av, t)[:, 0, :]       # (B, S)
    attn = jax.nn.softmax(scores, axis=-1)
    context = jnp.einsum('bs,bhs->bh', attn, x)              # (B, H)
    h1 = jax.nn.relu(context @ f1w.T + f1b[:, 0])
    h2 = jax.nn.relu(h1 @ f2w.T + f2b[:, 0])                 # (B, H)
    y = jnp.tanh(x + h2[:, :, None])                         # (B, H, S)
    probs = jnp.einsum('oh,bhs->bos', pv, y)[:, 0, :]        # (B, S)
    return probs


def init_params(key, hidden_size):
    # Deterministic synthetic initialization (shapes follow the module's
    # __init__; PyTorch inits v/W to zeros which would make the test
    # degenerate, so small random values are used instead).
    ks = jax.random.split(key, 7)
    bound = 1.0 / np.sqrt(hidden_size)
    W = jax.random.uniform(ks[0], (hidden_size, hidden_size), jnp.float32, -bound, bound)
    av = jax.random.uniform(ks[1], (1, hidden_size), jnp.float32, -bound, bound)
    f1w = jax.random.uniform(ks[2], (hidden_size, hidden_size), jnp.float32, -bound, bound)
    f1b = jax.random.uniform(ks[3], (hidden_size, 1), jnp.float32, -bound, bound)
    f2w = jax.random.uniform(ks[4], (hidden_size, hidden_size), jnp.float32, -bound, bound)
    f2b = jax.random.uniform(ks[5], (hidden_size, 1), jnp.float32, -bound, bound)
    pv = jax.random.uniform(ks[6], (1, hidden_size), jnp.float32, -bound, bound)
    return (W, av, f1w, f1b, f2w, f2b, pv)


if __name__ == "__main__":
    B, H, S = 2, 32, 8
    key = jax.random.PRNGKey(0)
    k_x, k_p = jax.random.split(key)
    all_hidden = jax.random.normal(k_x, (B, H, S), jnp.float32)
    params = init_params(k_p, H)

    probs = pointer_forward(all_hidden, params)          # f32 matmul path
    probs = jax.block_until_ready(probs)

    ref = pointer_reference(all_hidden, params)
    np.testing.assert_allclose(np.asarray(probs), np.asarray(ref),
                               rtol=1e-4, atol=1e-5)
    print("KERNEL_OK")
</pallas_src>

<mosaic_0001>
module attributes {stable_mosaic.version = 11 : i64} {
  func.func @pointer_kernel(%arg0: i32, %arg1: memref<32x128xf32, #tpu.memory_space<vmem>>, %arg2: memref<128x16xf32, #tpu.memory_space<vmem>>, %arg3: memref<16x128xf32, #tpu.memory_space<vmem>>, %arg4: memref<32x32xf32, #tpu.memory_space<vmem>>, %arg5: memref<1x32xf32, #tpu.memory_space<vmem>>, %arg6: memref<32x32xf32, #tpu.memory_space<vmem>>, %arg7: memref<32x1xf32, #tpu.memory_space<vmem>>, %arg8: memref<32x32xf32, #tpu.memory_space<vmem>>, %arg9: memref<32x1xf32, #tpu.memory_space<vmem>>, %arg10: memref<1x32xf32, #tpu.memory_space<vmem>>, %arg11: memref<1x128xf32, #tpu.memory_space<vmem>>) attributes {dimension_semantics = [#tpu.dimension_semantics<parallel>], iteration_bounds = array<i64: 1>, scalar_prefetch = 0 : i64, scratch_operands = 0 : i64, tpu.core_type = #tpu.core_type<tc>, window_params = [{transform_indices = @transform_0, window_bounds = array<i64: 32, 128>}, {pipeline_mode = #tpu.pipeline_mode<synchronous>, transform_indices = @transform_1, window_bounds = array<i64: 128, 16>}, {pipeline_mode = #tpu.pipeline_mode<synchronous>, transform_indices = @transform_2, window_bounds = array<i64: 16, 128>}, {pipeline_mode = #tpu.pipeline_mode<synchronous>, transform_indices = @transform_3, window_bounds = array<i64: 32, 32>}, {pipeline_mode = #tpu.pipeline_mode<synchronous>, transform_indices = @transform_4, window_bounds = array<i64: 1, 32>}, {pipeline_mode = #tpu.pipeline_mode<synchronous>, transform_indices = @transform_5, window_bounds = array<i64: 32, 32>}, {pipeline_mode = #tpu.pipeline_mode<synchronous>, transform_indices = @transform_6, window_bounds = array<i64: 32, 1>}, {pipeline_mode = #tpu.pipeline_mode<synchronous>, transform_indices = @transform_7, window_bounds = array<i64: 32, 32>}, {pipeline_mode = #tpu.pipeline_mode<synchronous>, transform_indices = @transform_8, window_bounds = array<i64: 32, 1>}, {pipeline_mode = #tpu.pipeline_mode<synchronous>, transform_indices = @transform_9, window_bounds = array<i64: 1, 32>}, {transform_indices = @transform_10, window_bounds = array<i64: 1, 128>}]} {
    %c0 = arith.constant 0 : index
    %c0_0 = arith.constant 0 : index
    %0 = vector.load %arg1[%c0, %c0_0] : memref<32x128xf32, #tpu.memory_space<vmem>>, vector<32x128xf32>
    %c0_1 = arith.constant 0 : index
    %c0_2 = arith.constant 0 : index
    %1 = vector.load %arg2[%c0_1, %c0_2] : memref<128x16xf32, #tpu.memory_space<vmem>>, vector<128x16xf32>
    %c0_3 = arith.constant 0 : index
    %c0_4 = arith.constant 0 : index
    %2 = vector.load %arg3[%c0_3, %c0_4] : memref<16x128xf32, #tpu.memory_space<vmem>>, vector<16x128xf32>
    %c0_5 = arith.constant 0 : index
    %c0_6 = arith.constant 0 : index
    %3 = vector.load %arg4[%c0_5, %c0_6] : memref<32x32xf32, #tpu.memory_space<vmem>>, vector<32x32xf32>
    %cst = arith.constant dense<0.000000e+00> : vector<32x128xf32>
    %4 = tpu.matmul %3, %0, %cst {dimension_numbers = #tpu.dot_dimension_numbers<[1], [0], [0], [1], [0, 0, 1, 1], [], []>} : vector<32x32xf32>, vector<32x128xf32>, vector<32x128xf32> -> vector<32x128xf32>
    %5 = math.tanh %4 : vector<32x128xf32>
    %c0_7 = arith.constant 0 : index
    %c0_8 = arith.constant 0 : index
    %6 = vector.load %arg5[%c0_7, %c0_8] : memref<1x32xf32, #tpu.memory_space<vmem>>, vector<1x32xf32>
    %cst_9 = arith.constant dense<0.000000e+00> : vector<1x128xf32>
    %7 = tpu.matmul %6, %5, %cst_9 {dimension_numbers = #tpu.dot_dimension_numbers<[1], [0], [0], [1], [0, 0, 1, 1], [], []>} : vector<1x32xf32>, vector<32x128xf32>, vector<1x128xf32> -> vector<1x128xf32>
    %cst_10 = arith.constant dense<0xFF800000> : vector<1xf32>
    %8 = vector.multi_reduction <maximumf>, %7, %cst_10 [1] : vector<1x128xf32> to vector<1xf32>
    %9 = vector.shape_cast %8 : vector<1xf32> to vector<1x1xf32>
    %10 = vector.broadcast %9 : vector<1x1xf32> to vector<1x128xf32>
    %11 = arith.subf %7, %10 : vector<1x128xf32>
    %12 = math.exp %11 : vector<1x128xf32>
    %cst_11 = arith.constant dense<0.000000e+00> : vector<1x16xf32>
    %13 = tpu.matmul %12, %1, %cst_11 {dimension_numbers = #tpu.dot_dimension_numbers<[1], [0], [0], [1], [0, 0, 1, 1], [], []>} : vector<1x128xf32>, vector<128x16xf32>, vector<1x16xf32> -> vector<1x16xf32>
    %cst_12 = arith.constant 1.000000e-30 : f32
    %14 = vector.broadcast %cst_12 : f32 to vector<1x16xf32>
    %15 = arith.maximumf %13, %14 : vector<1x16xf32>
    %16 = tpu.reciprocal %15 {approx = true} : vector<1x16xf32> -> vector<1x16xf32>
    %17 = arith.mulf %15, %16 : vector<1x16xf32>
    %cst_13 = arith.constant 2.000000e+00 : f32
    %18 = vector.broadcast %cst_13 : f32 to vector<1x16xf32>
    %19 = arith.subf %18, %17 : vector<1x16xf32>
    %20 = arith.mulf %16, %19 : vector<1x16xf32>
    %21 = vector.broadcast %12 : vector<1x128xf32> to vector<32x128xf32>
    %22 = arith.mulf %0, %21 : vector<32x128xf32>
    %cst_14 = arith.constant dense<0.000000e+00> : vector<32x16xf32>
    %23 = tpu.matmul %22, %1, %cst_14 {dimension_numbers = #tpu.dot_dimension_numbers<[1], [0], [0], [1], [0, 0, 1, 1], [], []>} : vector<32x128xf32>, vector<128x16xf32>, vector<32x16xf32> -> vector<32x16xf32>
    %24 = vector.broadcast %20 : vector<1x16xf32> to vector<32x16xf32>
    %25 = arith.mulf %23, %24 : vector<32x16xf32>
    %c0_15 = arith.constant 0 : index
    %c0_16 = arith.constant 0 : index
    %26 = vector.load %arg6[%c0_15, %c0_16] : memref<32x32xf32, #tpu.memory_space<vmem>>, vector<32x32xf32>
    %cst_17 = arith.constant dense<0.000000e+00> : vector<32x16xf32>
    %27 = tpu.matmul %26, %25, %cst_17 {dimension_numbers = #tpu.dot_dimension_numbers<[1], [0], [0], [1], [0, 0, 1, 1], [], []>} : vector<32x32xf32>, vector<32x16xf32>, vector<32x16xf32> -> vector<32x16xf32>
    %c0_18 = arith.constant 0 : index
    %c0_19 = arith.constant 0 : index
    %28 = vector.load %arg7[%c0_18, %c0_19] : memref<32x1xf32, #tpu.memory_space<vmem>>, vector<32x1xf32>
    %29 = vector.broadcast %28 : vector<32x1xf32> to vector<32x16xf32>
    %30 = arith.addf %27, %29 : vector<32x16xf32>
    %cst_20 = arith.constant 0.000000e+00 : f32
    %31 = vector.broadcast %cst_20 : f32 to vector<32x16xf32>
    %32 = arith.maximumf %30, %31 : vector<32x16xf32>
    %c0_21 = arith.constant 0 : index
    %c0_22 = arith.constant 0 : index
    %33 = vector.load %arg8[%c0_21, %c0_22] : memref<32x32xf32, #tpu.memory_space<vmem>>, vector<32x32xf32>
    %cst_23 = arith.constant dense<0.000000e+00> : vector<32x16xf32>
    %34 = tpu.matmul %33, %32, %cst_23 {dimension_numbers = #tpu.dot_dimension_numbers<[1], [0], [0], [1], [0, 0, 1, 1], [], []>} : vector<32x32xf32>, vector<32x16xf32>, vector<32x16xf32> -> vector<32x16xf32>
    %c0_24 = arith.constant 0 : index
    %c0_25 = arith.constant 0 : index
    %35 = vector.load %arg9[%c0_24, %c0_25] : memref<32x1xf32, #tpu.memory_space<vmem>>, vector<32x1xf32>
    %36 = vector.broadcast %35 : vector<32x1xf32> to vector<32x16xf32>
    %37 = arith.addf %34, %36 : vector<32x16xf32>
    %cst_26 = arith.constant 0.000000e+00 : f32
    %38 = vector.broadcast %cst_26 : f32 to vector<32x16xf32>
    %39 = arith.maximumf %37, %38 : vector<32x16xf32>
    %c0_27 = arith.constant 0 : index
    %c0_28 = arith.constant 0 : index
    %40 = vector.load %arg1[%c0_27, %c0_28] : memref<32x128xf32, #tpu.memory_space<vmem>>, vector<32x128xf32>
    %cst_29 = arith.constant dense<0.000000e+00> : vector<32x128xf32>
    %41 = tpu.matmul %39, %2, %cst_29 {dimension_numbers = #tpu.dot_dimension_numbers<[1], [0], [0], [1], [0, 0, 1, 1], [], []>} : vector<32x16xf32>, vector<16x128xf32>, vector<32x128xf32> -> vector<32x128xf32>
    %42 = arith.addf %40, %41 : vector<32x128xf32>
    %43 = math.tanh %42 : vector<32x128xf32>
    %c0_30 = arith.constant 0 : index
    %c0_31 = arith.constant 0 : index
    %44 = vector.load %arg10[%c0_30, %c0_31] : memref<1x32xf32, #tpu.memory_space<vmem>>, vector<1x32xf32>
    %cst_32 = arith.constant dense<0.000000e+00> : vector<1x128xf32>
    %45 = tpu.matmul %44, %43, %cst_32 {dimension_numbers = #tpu.dot_dimension_numbers<[1], [0], [0], [1], [0, 0, 1, 1], [], []>} : vector<1x32xf32>, vector<32x128xf32>, vector<1x128xf32> -> vector<1x128xf32>
    %c0_33 = arith.constant 0 : index
    %c0_34 = arith.constant 0 : index
    %46 = vector.load %arg11[%c0_33, %c0_34] : memref<1x128xf32, #tpu.memory_space<vmem>>, vector<1x128xf32>
    tpu.vector_store %arg11[%c0_33, %c0_34], %45 {strides = array<i32>} : memref<1x128xf32, #tpu.memory_space<vmem>>, vector<1x128xf32>,
    return
  }
  func.func @transform_0(%arg0: i32) -> (i32, i32) {
    %c0_i32 = arith.constant 0 : i32
    %c0_i32_0 = arith.constant 0 : i32
    return %c0_i32, %arg0 : i32, i32
  }
  func.func @transform_1(%arg0: i32) -> (i32, i32) {
    %c0_i32 = arith.constant 0 : i32
    %c0_i32_0 = arith.constant 0 : i32
    %c0_i32_1 = arith.constant 0 : i32
    return %c0_i32, %c0_i32_0 : i32, i32
  }
  func.func @transform_2(%arg0: i32) -> (i32, i32) {
    %c0_i32 = arith.constant 0 : i32
    %c0_i32_0 = arith.constant 0 : i32
    %c0_i32_1 = arith.constant 0 : i32
    return %c0_i32, %c0_i32_0 : i32, i32
  }
  func.func @transform_3(%arg0: i32) -> (i32, i32) {
    %c0_i32 = arith.constant 0 : i32
    %c0_i32_0 = arith.constant 0 : i32
    %c0_i32_1 = arith.constant 0 : i32
    return %c0_i32, %c0_i32_0 : i32, i32
  }
  func.func @transform_4(%arg0: i32) -> (i32, i32) {
    %c0_i32 = arith.constant 0 : i32
    %c0_i32_0 = arith.constant 0 : i32
    %c0_i32_1 = arith.constant 0 : i32
    return %c0_i32, %c0_i32_0 : i32, i32
  }
  func.func @transform_5(%arg0: i32) -> (i32, i32) {
    %c0_i32 = arith.constant 0 : i32
    %c0_i32_0 = arith.constant 0 : i32
    %c0_i32_1 = arith.constant 0 : i32
    return %c0_i32, %c0_i32_0 : i32, i32
  }
  func.func @transform_6(%arg0: i32) -> (i32, i32) {
    %c0_i32 = arith.constant 0 : i32
    %c0_i32_0 = arith.constant 0 : i32
    %c0_i32_1 = arith.constant 0 : i32
    return %c0_i32, %c0_i32_0 : i32, i32
  }
  func.func @transform_7(%arg0: i32) -> (i32, i32) {
    %c0_i32 = arith.constant 0 : i32
    %c0_i32_0 = arith.constant 0 : i32
    %c0_i32_1 = arith.constant 0 : i32
    return %c0_i32, %c0_i32_0 : i32, i32
  }
  func.func @transform_8(%arg0: i32) -> (i32, i32) {
    %c0_i32 = arith.constant 0 : i32
    %c0_i32_0 = arith.constant 0 : i32
    %c0_i32_1 = arith.constant 0 : i32
    return %c0_i32, %c0_i32_0 : i32, i32
  }
  func.func @transform_9(%arg0: i32) -> (i32, i32) {
    %c0_i32 = arith.constant 0 : i32
    %c0_i32_0 = arith.constant 0 : i32
    %c0_i32_1 = arith.constant 0 : i32
    return %c0_i32, %c0_i32_0 : i32, i32
  }
  func.func @transform_10(%arg0: i32) -> (i32, i32) {
    %c0_i32 = arith.constant 0 : i32
    %c0_i32_0 = arith.constant 0 : i32
    return %c0_i32, %arg0 : i32, i32
  }
}

</mosaic_0001>

<llo_original>
// kernel: tpu_custom_call.1
$region0: #{tpu_custom_call.1}
  #allocation0 [shape = 'u32[]', space=smem, size = 0x4, offset = 0x4, fixed_abs, tag = 'smem constant byte address 0x4 - core index']
  #allocation1 [shape = 'u32[144,128]{1,0:T(1,128)}', space=vmem, size = 0x12000, scoped, tag = 'internal scratch']
  %s0 = inlined_call_operand.vmem [shape: f32[32,128], index: 0, kind: input, shape index: {}]
  %s1 = inlined_call_operand.vmem [shape: f32[128,16], index: 1, kind: input, shape index: {}]
  %s2 = inlined_call_operand.vmem [shape: f32[16,128], index: 2, kind: input, shape index: {}]
  %s3 = inlined_call_operand.vmem [shape: f32[32,32], index: 3, kind: input, shape index: {}]
  %s4 = inlined_call_operand.vmem [shape: f32[1,32], index: 4, kind: input, shape index: {}]
  %s5 = inlined_call_operand.vmem [shape: f32[32,32], index: 5, kind: input, shape index: {}]
  %s6 = inlined_call_operand.vmem [shape: f32[32,1], index: 6, kind: input, shape index: {}]
  %s7 = inlined_call_operand.vmem [shape: f32[32,32], index: 7, kind: input, shape index: {}]
  %s8 = inlined_call_operand.vmem [shape: f32[32,1], index: 8, kind: input, shape index: {}]
  %s9 = inlined_call_operand.vmem [shape: f32[1,32], index: 9, kind: input, shape index: {}]
  %s10 = inlined_call_operand.hbm [shape: f32[1,128], index: 10, kind: output, shape index: {}]
  %s11 = sld [smem:[#allocation0]]
  $region50: #{tpu_custom_call.1} parent=0
    _
  %s13 = ssub.s32 1, %s11
  %s14 = scalar_select 0, %s13, %s11
  $region1: #{tpu_custom_call.1} parent=0
    #allocation2 [shape = 'u8[512]{0}', space=vmem, size = 0x400, scoped, tag = 'output window, operand 0, single buffered']
    #allocation3 [shape = 's32[1]{0}', space=sflag, size = 0x4, scoped, tag = 'scoped memory for tpu_custom_call.1']
    %15 = vsyncpa [#allocation3], 0
    // Predicated region
    $region2: #{tpu_custom_call.1} parent=1 // pred_check
      _
    $region3: #{tpu_custom_call.1} parent=1 // pred_check_branch
      %17 = sbr.rel (0) target = $region5
    $region4: #{tpu_custom_call.1} parent=1 // pred_region
      _
    $region5: #{tpu_custom_call.1} parent=1 // pred_fallthru
      _
    // Predicated region
    $region6: #{tpu_custom_call.1} parent=1 // pred_check
      _
    $region7: #{tpu_custom_call.1} parent=1 // pred_check_branch
      %19 = sbr.rel (0) target = $region9
    $region8: #{tpu_custom_call.1} parent=1 // pred_region
      _
    $region9: #{tpu_custom_call.1} parent=1 // pred_fallthru
      _
    // Predicated region
    $region10: #{tpu_custom_call.1} parent=1 // pred_check
      _
    $region11: #{tpu_custom_call.1} parent=1 // pred_check_branch
      %21 = sbr.rel (0) target = $region13
    $region12: #{tpu_custom_call.1} parent=1 // pred_region
      _
    $region13: #{tpu_custom_call.1} parent=1 // pred_fallthru
      _
    // Predicated region
    $region14: #{tpu_custom_call.1} parent=1 // pred_check
      _
    $region15: #{tpu_custom_call.1} parent=1 // pred_check_branch
      %23 = sbr.rel (0) target = $region17
    $region16: #{tpu_custom_call.1} parent=1 // pred_region
      _
    $region17: #{tpu_custom_call.1} parent=1 // pred_fallthru
      _
    // Predicated region
    $region18: #{tpu_custom_call.1} parent=1 // pred_check
      _
    $region19: #{tpu_custom_call.1} parent=1 // pred_check_branch
      %25 = sbr.rel (0) target = $region21
    $region20: #{tpu_custom_call.1} parent=1 // pred_region
      _
    $region21: #{tpu_custom_call.1} parent=1 // pred_fallthru
      _
    // Predicated region
    $region22: #{tpu_custom_call.1} parent=1 // pred_check
      _
    $region23: #{tpu_custom_call.1} parent=1 // pred_check_branch
      %27 = sbr.rel (0) target = $region25
    $region24: #{tpu_custom_call.1} parent=1 // pred_region
      _
    $region25: #{tpu_custom_call.1} parent=1 // pred_fallthru
      _
    // Predicated region
    $region26: #{tpu_custom_call.1} parent=1 // pred_check
      _
    $region27: #{tpu_custom_call.1} parent=1 // pred_check_branch
      %29 = sbr.rel (0) target = $region29
    $region28: #{tpu_custom_call.1} parent=1 // pred_region
      _
    $region29: #{tpu_custom_call.1} parent=1 // pred_fallthru
      _
    // Predicated region
    $region30: #{tpu_custom_call.1} parent=1 // pred_check
      _
    $region31: #{tpu_custom_call.1} parent=1 // pred_check_branch
      %31 = sbr.rel (0) target = $region33
    $region32: #{tpu_custom_call.1} parent=1 // pred_region
      _
    $region33: #{tpu_custom_call.1} parent=1 // pred_fallthru
      _
    // Predicated region
    $region34: #{tpu_custom_call.1} parent=1 // pred_check
      _
    $region35: #{tpu_custom_call.1} parent=1 // pred_check_branch
      %33 = sbr.rel (0) target = $region37
    $region36: #{tpu_custom_call.1} parent=1 // pred_region
      _
    $region37: #{tpu_custom_call.1} parent=1 // pred_fallthru
      _
    // Predicated region
    $region38: #{tpu_custom_call.1} parent=1 // pred_check
      _
    $region39: #{tpu_custom_call.1} parent=1 // pred_check_branch
      %35 = sbr.rel (0) target = $region41
    $region40: #{tpu_custom_call.1} parent=1 // pred_region
      _
    $region41: #{tpu_custom_call.1} parent=1 // pred_fallthru
      _
    %v36 = vld [vmem:[%s0] sm:$0xff]
    %v37 = vld [vmem:[%s0 + $0x8] sm:$0xff]
    %v38 = vld [vmem:[%s0 + $0x10] sm:$0xff]
    %v39 = vld [vmem:[%s0 + $0x18] sm:$0xff]
    %v40 = vld [vmem:[%s1] sm:$0xff]
    %v41 = vld [vmem:[%s1 + $0x8] sm:$0xff]
    %v42 = vld [vmem:[%s1 + $0x10] sm:$0xff]
    %v43 = vld [vmem:[%s1 + $0x18] sm:$0xff]
    %v44 = vld [vmem:[%s1 + $0x20] sm:$0xff]
    %v45 = vld [vmem:[%s1 + $0x28] sm:$0xff]
    %v46 = vld [vmem:[%s1 + $0x30] sm:$0xff]
    %v47 = vld [vmem:[%s1 + $0x38] sm:$0xff]
    %v48 = vld [vmem:[%s1 + $0x40] sm:$0xff]
    %v49 = vld [vmem:[%s1 + $0x48] sm:$0xff]
    %v50 = vld [vmem:[%s1 + $0x50] sm:$0xff]
    %v51 = vld [vmem:[%s1 + $0x58] sm:$0xff]
    %v52 = vld [vmem:[%s1 + $0x60] sm:$0xff]
    %v53 = vld [vmem:[%s1 + $0x68] sm:$0xff]
    %v54 = vld [vmem:[%s1 + $0x70] sm:$0xff]
    %v55 = vld [vmem:[%s1 + $0x78] sm:$0xff]
    %v56 = vld [vmem:[%s2] sm:$0xff]
    %v57 = vld [vmem:[%s2 + $0x8] sm:$0xff]
    %v58 = vld [vmem:[%s3] sm:$0xff]
    %v59 = vld [vmem:[%s3 + $0x8] sm:$0xff]
    %v60 = vld [vmem:[%s3 + $0x10] sm:$0xff]
    %v61 = vld [vmem:[%s3 + $0x18] sm:$0xff]
    %vm62 = vcmask 261120
    %v64 = vsel %vm62, %v58, 0
    %v67 = vsel %vm62, %v59, 0
    %v70 = vsel %vm62, %v60, 0
    %v73 = vsel %vm62, %v61, 0
    %75 = vmatprep.subr.mxu0 0.0
    %76 = vmatpush1.msra.mxu0 %v36
    %77 = vmatprep.subr.mxu0 0.0
    %78 = vmatpush1.msra.mxu0 %v37
    %79 = vmatprep.subr.mxu0 0.0
    %80 = vmatpush1.msra.mxu0 %v38
    %81 = vmatprep.subr.mxu0 0.0
    %82 = vmatpush1.msra.mxu0 %v39
    %83 = vmatprep.subr.mxu0 0.0
    %84 = vmatpush1.msra.mxu0 0.0
    %85 = vmatprep.subr.mxu0 0.0
    %86 = vmatpush1.msra.mxu0 0.0
    %87 = vmatprep.subr.mxu0 0.0
    %88 = vmatpush1.msra.mxu0 0.0
    %89 = vmatprep.subr.mxu0 0.0
    %90 = vmatpush1.msra.mxu0 0.0
    %91 = vmatprep.subr.mxu0 0.0
    %92 = vmatpush1.msra.mxu0 0.0
    %93 = vmatprep.subr.mxu0 0.0
    %94 = vmatpush1.msra.mxu0 0.0
    %95 = vmatprep.subr.mxu0 0.0
    %96 = vmatpush1.msra.mxu0 0.0
    %97 = vmatprep.subr.mxu0 0.0
    %98 = vmatpush1.msra.mxu0 0.0
    %99 = vmatprep.subr.mxu0 0.0
    %100 = vmatpush1.msra.mxu0 0.0
    %101 = vmatprep.subr.mxu0 0.0
    %102 = vmatpush1.msra.mxu0 0.0
    %103 = vmatprep.subr.mxu0 0.0
    %104 = vmatpush1.msra.mxu0 0.0
    %105 = vmatprep.subr.mxu0 0.0
    %106 = vmatpush1.msra.mxu0 0.0
    %107 = vmatprep.subr.mxu0 0.0
    %108 = vmatpush1.msra.mxu0 0.0
    %109 = vmatprep.subr.mxu0 0.0
    %110 = vmatpush1.msra.mxu0 0.0
    %111 = vmatprep.subr.mxu0 0.0
    %112 = vmatpush1.msra.mxu0 0.0
    %113 = vmatprep.subr.mxu0 0.0
    %114 = vmatpush1.msra.mxu0 0.0
    %115 = vmatprep.subr.mxu0 0.0
    %116 = vmatpush1.msra.mxu0 0.0
    %117 = vmatprep.subr.mxu0 0.0
    %118 = vmatpush1.msra.mxu0 0.0
    %119 = vmatprep.subr.mxu0 0.0
    %120 = vmatpush1.msra.mxu0 0.0
    %121 = vmatprep.subr.mxu0 0.0
    %122 = vmatpush1.msra.mxu0 0.0
    %123 = vmatprep.subr.mxu0 0.0
    %124 = vmatpush1.msra.mxu0 0.0
    %125 = vmatprep.subr.mxu0 0.0
    %126 = vmatpush1.msra.mxu0 0.0
    %127 = vmatprep.subr.mxu0 0.0
    %128 = vmatpush1.msra.mxu0 0.0
    %129 = vmatprep.subr.mxu0 0.0
    %130 = vmatpush1.msra.mxu0 0.0
    %131 = vmatprep.subr.mxu0 0.0
    %132 = vmatpush1.msra.mxu0 0.0
    %133 = vmatprep.subr.mxu0 0.0
    %134 = vmatpush1.msra.mxu0 0.0
    %135 = vmatprep.subr.mxu0 0.0
    %136 = vmatpush1.msra.mxu0 0.0
    %137 = vmatprep.subr.mxu0 0.0
    %138 = vmatpush1.msra.mxu0 0.0
    %139 = vmatprep.mubr.f32.mxu0 0.0
    %140 = vmatmul.mubr.f32.gmra.mrb[0].mxu0 %v64
    %v141 = vpop.f32.mrb[0].mxu0
    %v142 = vadd.f32 0.0, %v141
    %v143 = vpop.f32.mrb[0].mxu0
    %144 = vmatprep.mubr.f32.mxu0 0.0
    %145 = vmatmul.mubr.f32.gmra.mrb[0].mxu0 %v67
    %v146 = vpop.f32.mrb[0].mxu0
    %v147 = vadd.f32 0.0, %v146
    %v148 = vpop.f32.mrb[0].mxu0
    %149 = vmatprep.mubr.f32.mxu0 0.0
    %150 = vmatmul.mubr.f32.gmra.mrb[0].mxu0 %v70
    %v151 = vpop.f32.mrb[0].mxu0
    %v152 = vadd.f32 0.0, %v151
    %v153 = vpop.f32.mrb[0].mxu0
    %154 = vmatprep.mubr.f32.mxu0 0.0
    %155 = vmatmul.mubr.f32.gmra.mrb[0].mxu0 %v73
    %v156 = vpop.f32.mrb[0].mxu0
    %v157 = vadd.f32 0.0, %v156
    %v158 = vpop.f32.mrb[0].mxu0
    %159 = vdwg.mxu0
    %v160 = vtanh.pop %v142
    %v161 = vtanh.pop %v147
    %v162 = vtanh.pop %v152
    %v163 = vtanh.pop %v157
    %v164 = vld [vmem:[%s4] sm:$0x1]
    %v166 = vsel %vm62, %v164, 0
    %168 = vmatprep.subr.mxu0 0.0
    %169 = vmatpush1.msra.mxu0 %v160
    %170 = vmatprep.subr.mxu0 0.0
    %171 = vmatpush1.msra.mxu0 %v161
    %172 = vmatprep.subr.mxu0 0.0
    %173 = vmatpush1.msra.mxu0 %v162
    %174 = vmatprep.subr.mxu0 0.0
    %175 = vmatpush1.msra.mxu0 %v163
    %176 = vmatprep.subr.mxu0 0.0
    %177 = vmatpush1.msra.mxu0 0.0
    %178 = vmatprep.subr.mxu0 0.0
    %179 = vmatpush1.msra.mxu0 0.0
    %180 = vmatprep.subr.mxu0 0.0
    %181 = vmatpush1.msra.mxu0 0.0
    %182 = vmatprep.subr.mxu0 0.0
    %183 = vmatpush1.msra.mxu0 0.0
    %184 = vmatprep.subr.mxu0 0.0
    %185 = vmatpush1.msra.mxu0 0.0
    %186 = vmatprep.subr.mxu0 0.0
    %187 = vmatpush1.msra.mxu0 0.0
    %188 = vmatprep.subr.mxu0 0.0
    %189 = vmatpush1.msra.mxu0 0.0
    %190 = vmatprep.subr.mxu0 0.0
    %191 = vmatpush1.msra.mxu0 0.0
    %192 = vmatprep.subr.mxu0 0.0
    %193 = vmatpush1.msra.mxu0 0.0
    %194 = vmatprep.subr.mxu0 0.0
    %195 = vmatpush1.msra.mxu0 0.0
    %196 = vmatprep.subr.mxu0 0.0
    %197 = vmatpush1.msra.mxu0 0.0
    %198 = vmatprep.subr.mxu0 0.0
    %199 = vmatpush1.msra.mxu0 0.0
    %200 = vmatprep.subr.mxu0 0.0
    %201 = vmatpush1.msra.mxu0 0.0
    %202 = vmatprep.subr.mxu0 0.0
    %203 = vmatpush1.msra.mxu0 0.0
    %204 = vmatprep.subr.mxu0 0.0
    %205 = vmatpush1.msra.mxu0 0.0
    %206 = vmatprep.subr.mxu0 0.0
    %207 = vmatpush1.msra.mxu0 0.0
    %208 = vmatprep.subr.mxu0 0.0
    %209 = vmatpush1.msra.mxu0 0.0
    %210 = vmatprep.subr.mxu0 0.0
    %211 = vmatpush1.msra.mxu0 0.0
    %212 = vmatprep.subr.mxu0 0.0
    %213 = vmatpush1.msra.mxu0 0.0
    %214 = vmatprep.subr.mxu0 0.0
    %215 = vmatpush1.msra.mxu0 0.0
    %216 = vmatprep.subr.mxu0 0.0
    %217 = vmatpush1.msra.mxu0 0.0
    %218 = vmatprep.subr.mxu0 0.0
    %219 = vmatpush1.msra.mxu0 0.0
    %220 = vmatprep.subr.mxu0 0.0
    %221 = vmatpush1.msra.mxu0 0.0
    %222 = vmatprep.subr.mxu0 0.0
    %223 = vmatpush1.msra.mxu0 0.0
    %224 = vmatprep.subr.mxu0 0.0
    %225 = vmatpush1.msra.mxu0 0.0
    %226 = vmatprep.subr.mxu0 0.0
    %227 = vmatpush1.msra.mxu0 0.0
    %228 = vmatprep.subr.mxu0 0.0
    %229 = vmatpush1.msra.mxu0 0.0
    %230 = vmatprep.subr.mxu0 0.0
    %231 = vmatpush1.msra.mxu0 0.0
    %232 = vmatprep.mubr.f32.mxu0 0.0
    %233 = vmatmul.mubr.f32.gmra.mrb[0].mxu0 %v166
    %v234 = vpop.f32.mrb[0].mxu0
    %v235 = vadd.f32 0.0, %v234
    %v236 = vpop.f32.mrb[0].mxu0
    %237 = vdwg.mxu0
    %vm238 = vcmask 1040384
    %v239 = vsel %vm238, %v235, -inf
    %240 = vmax.xlane.f32.xlu0 %v239
    %v241 = vpop.xlane.xlu0 %240
    %v242 = vsub.f32 %v235, %v241
    %v243 = vmul.f32 %v242, 1.442695
    %v244 = vpow.pop %v243
    %245 = vmatprep.subr.mxu0 0.0
    %246 = vmatpush1.msra.mxu0 %v40
    %247 = vmatprep.subr.mxu0 0.0
    %248 = vmatpush1.msra.mxu0 %v41
    %249 = vmatprep.subr.mxu0 0.0
    %250 = vmatpush1.msra.mxu0 %v42
    %251 = vmatprep.subr.mxu0 0.0
    %252 = vmatpush1.msra.mxu0 %v43
    %253 = vmatprep.subr.mxu0 0.0
    %254 = vmatpush1.msra.mxu0 %v44
    %255 = vmatprep.subr.mxu0 0.0
    %256 = vmatpush1.msra.mxu0 %v45
    %257 = vmatprep.subr.mxu0 0.0
    %258 = vmatpush1.msra.mxu0 %v46
    %259 = vmatprep.subr.mxu0 0.0
    %260 = vmatpush1.msra.mxu0 %v47
    %261 = vmatprep.subr.mxu0 0.0
    %262 = vmatpush1.msra.mxu0 %v48
    %263 = vmatprep.subr.mxu0 0.0
    %264 = vmatpush1.msra.mxu0 %v49
    %265 = vmatprep.subr.mxu0 0.0
    %266 = vmatpush1.msra.mxu0 %v50
    %267 = vmatprep.subr.mxu0 0.0
    %268 = vmatpush1.msra.mxu0 %v51
    %269 = vmatprep.subr.mxu0 0.0
    %270 = vmatpush1.msra.mxu0 %v52
    %271 = vmatprep.subr.mxu0 0.0
    %272 = vmatpush1.msra.mxu0 %v53
    %273 = vmatprep.subr.mxu0 0.0
    %274 = vmatpush1.msra.mxu0 %v54
    %275 = vmatprep.subr.mxu0 0.0
    %276 = vmatpush1.msra.mxu0 %v55
    %277 = vmatprep.subr.mxu0 0.0
    %278 = vmatpush1.msra.mxu0 0.0
    %279 = vmatprep.subr.mxu0 0.0
    %280 = vmatpush1.msra.mxu0 0.0
    %281 = vmatprep.subr.mxu0 0.0
    %282 = vmatpush1.msra.mxu0 0.0
    %283 = vmatprep.subr.mxu0 0.0
    %284 = vmatpush1.msra.mxu0 0.0
    %285 = vmatprep.subr.mxu0 0.0
    %286 = vmatpush1.msra.mxu0 0.0
    %287 = vmatprep.subr.mxu0 0.0
    %288 = vmatpush1.msra.mxu0 0.0
    %289 = vmatprep.subr.mxu0 0.0
    %290 = vmatpush1.msra.mxu0 0.0
    %291 = vmatprep.subr.mxu0 0.0
    %292 = vmatpush1.msra.mxu0 0.0
    %293 = vmatprep.subr.mxu0 0.0
    %294 = vmatpush1.msra.mxu0 0.0
    %295 = vmatprep.subr.mxu0 0.0
    %296 = vmatpush1.msra.mxu0 0.0
    %297 = vmatprep.subr.mxu0 0.0
    %298 = vmatpush1.msra.mxu0 0.0
    %299 = vmatprep.subr.mxu0 0.0
    %300 = vmatpush1.msra.mxu0 0.0
    %301 = vmatprep.subr.mxu0 0.0
    %302 = vmatpush1.msra.mxu0 0.0
    %303 = vmatprep.subr.mxu0 0.0
    %304 = vmatpush1.msra.mxu0 0.0
    %305 = vmatprep.subr.mxu0 0.0
    %306 = vmatpush1.msra.mxu0 0.0
    %307 = vmatprep.subr.mxu0 0.0
    %308 = vmatpush1.msra.mxu0 0.0
    %309 = vmatprep.mubr.f32.mxu0 0.0
    %310 = vmatmul.mubr.f32.gmra.mrb[0].mxu0 %v244
    %v311 = vpop.f32.mrb[0].mxu0
    %v312 = vadd.f32 0.0, %v311
    %v313 = vpop.f32.mrb[0].mxu0
    %314 = vdwg.mxu0
    %v315 = vmax.f32 %v312, 1e-30
    %v316 = vrcp.pop %v315
    %v317 = vmul.f32 %v315, %v316
    %v318 = vsub.f32 2.0, %v317
    %v319 = vmul.f32 %v316, %v318
    %v320 = vlaneseq
    %v321 = vshrl.u32 %v320, 7
    %v322 = vsub.s32 0, %v321
    %v323 = vrot.slane %v244, %v322
    %v324 = vmul.f32 %v36, %v323
    %v325 = vmul.f32 %v37, %v323
    %v326 = vmul.f32 %v38, %v323
    %v327 = vmul.f32 %v39, %v323
    %328 = vmatprep.subr.mxu0 0.0
    %329 = vmatpush1.msra.mxu0 %v40
    %330 = vmatprep.subr.mxu0 0.0
    %331 = vmatpush1.msra.mxu0 %v41
    %332 = vmatprep.subr.mxu0 0.0
    %333 = vmatpush1.msra.mxu0 %v42
    %334 = vmatprep.subr.mxu0 0.0
    %335 = vmatpush1.msra.mxu0 %v43
    %336 = vmatprep.subr.mxu0 0.0
    %337 = vmatpush1.msra.mxu0 %v44
    %338 = vmatprep.subr.mxu0 0.0
    %339 = vmatpush1.msra.mxu0 %v45
    %340 = vmatprep.subr.mxu0 0.0
    %341 = vmatpush1.msra.mxu0 %v46
    %342 = vmatprep.subr.mxu0 0.0
    %343 = vmatpush1.msra.mxu0 %v47
    %344 = vmatprep.subr.mxu0 0.0
    %345 = vmatpush1.msra.mxu0 %v48
    %346 = vmatprep.subr.mxu0 0.0
    %347 = vmatpush1.msra.mxu0 %v49
    %348 = vmatprep.subr.mxu0 0.0
    %349 = vmatpush1.msra.mxu0 %v50
    %350 = vmatprep.subr.mxu0 0.0
    %351 = vmatpush1.msra.mxu0 %v51
    %352 = vmatprep.subr.mxu0 0.0
    %353 = vmatpush1.msra.mxu0 %v52
    %354 = vmatprep.subr.mxu0 0.0
    %355 = vmatpush1.msra.mxu0 %v53
    %356 = vmatprep.subr.mxu0 0.0
    %357 = vmatpush1.msra.mxu0 %v54
    %358 = vmatprep.subr.mxu0 0.0
    %359 = vmatpush1.msra.mxu0 %v55
    %360 = vmatprep.subr.mxu0 0.0
    %361 = vmatpush1.msra.mxu0 0.0
    %362 = vmatprep.subr.mxu0 0.0
    %363 = vmatpush1.msra.mxu0 0.0
    %364 = vmatprep.subr.mxu0 0.0
    %365 = vmatpush1.msra.mxu0 0.0
    %366 = vmatprep.subr.mxu0 0.0
    %367 = vmatpush1.msra.mxu0 0.0
    %368 = vmatprep.subr.mxu0 0.0
    %369 = vmatpush1.msra.mxu0 0.0
    %370 = vmatprep.subr.mxu0 0.0
    %371 = vmatpush1.msra.mxu0 0.0
    %372 = vmatprep.subr.mxu0 0.0
    %373 = vmatpush1.msra.mxu0 0.0
    %374 = vmatprep.subr.mxu0 0.0
    %375 = vmatpush1.msra.mxu0 0.0
    %376 = vmatprep.subr.mxu0 0.0
    %377 = vmatpush1.msra.mxu0 0.0
    %378 = vmatprep.subr.mxu0 0.0
    %379 = vmatpush1.msra.mxu0 0.0
    %380 = vmatprep.subr.mxu0 0.0
    %381 = vmatpush1.msra.mxu0 0.0
    %382 = vmatprep.subr.mxu0 0.0
    %383 = vmatpush1.msra.mxu0 0.0
    %384 = vmatprep.subr.mxu0 0.0
    %385 = vmatpush1.msra.mxu0 0.0
    %386 = vmatprep.subr.mxu0 0.0
    %387 = vmatpush1.msra.mxu0 0.0
    %388 = vmatprep.subr.mxu0 0.0
    %389 = vmatpush1.msra.mxu0 0.0
    %390 = vmatprep.subr.mxu0 0.0
    %391 = vmatpush1.msra.mxu0 0.0
    %392 = vmatprep.mubr.f32.mxu0 0.0
    %393 = vmatmul.mubr.f32.gmra.mrb[0].mxu0 %v324
    %v394 = vpop.f32.mrb[0].mxu0
    %v395 = vadd.f32 0.0, %v394
    %v396 = vpop.f32.mrb[0].mxu0
    %397 = vmatprep.mubr.f32.mxu0 0.0
    %398 = vmatmul.mubr.f32.gmra.mrb[0].mxu0 %v325
    %v399 = vpop.f32.mrb[0].mxu0
    %v400 = vadd.f32 0.0, %v399
    %v401 = vpop.f32.mrb[0].mxu0
    %402 = vmatprep.mubr.f32.mxu0 0.0
    %403 = vmatmul.mubr.f32.gmra.mrb[0].mxu0 %v326
    %v404 = vpop.f32.mrb[0].mxu0
    %v405 = vadd.f32 0.0, %v404
    %v406 = vpop.f32.mrb[0].mxu0
    %407 = vmatprep.mubr.f32.mxu0 0.0
    %408 = vmatmul.mubr.f32.gmra.mrb[0].mxu0 %v327
    %v409 = vpop.f32.mrb[0].mxu0
    %v410 = vadd.f32 0.0, %v409
    %v411 = vpop.f32.mrb[0].mxu0
    %412 = vdwg.mxu0
    %v413 = vlaneseq
    %v414 = vshrl.u32 %v413, 7
    %v415 = vsub.s32 0, %v414
    %v416 = vrot.slane %v319, %v415
    %v417 = vmul.f32 %v395, %v416
    %v418 = vmul.f32 %v400, %v416
    %v419 = vmul.f32 %v405, %v416
    %v420 = vmul.f32 %v410, %v416
    %v421 = vld [vmem:[%s5] sm:$0xff]
    %v422 = vld [vmem:[%s5 + $0x8] sm:$0xff]
    %v423 = vld [vmem:[%s5 + $0x10] sm:$0xff]
    %v424 = vld [vmem:[%s5 + $0x18] sm:$0xff]
    %v425 = vld [vmem:[%s6] sm:$0xff]
    %v426 = vld [vmem:[%s6 + $0x8] sm:$0xff]
    %v427 = vld [vmem:[%s6 + $0x10] sm:$0xff]
    %v428 = vld [vmem:[%s6 + $0x18] sm:$0xff]
    %430 = vset.pattern.permute.xlu0 0
    %431 = vperm.xlu0 %430, %v425
    %v432 = vpop.permute.xlu0 %431
    %435 = vset.pattern.permute.xlu0 0
    %436 = vperm.xlu0 %435, %v426
    %v437 = vpop.permute.xlu0 %436
    %440 = vset.pattern.permute.xlu0 0
    %441 = vperm.xlu0 %440, %v427
    %v442 = vpop.permute.xlu0 %441
    %445 = vset.pattern.permute.xlu0 0
    %446 = vperm.xlu0 %445, %v428
    %v447 = vpop.permute.xlu0 %446
    %v450 = vsel %vm62, %v421, 0
    %v453 = vsel %vm62, %v422, 0
    %v456 = vsel %vm62, %v423, 0
    %v459 = vsel %vm62, %v424, 0
    %461 = vmatprep.subr.mxu0 0.0
    %462 = vmatpush1.msra.mxu0 %v417
    %463 = vmatprep.subr.mxu0 0.0
    %464 = vmatpush1.msra.mxu0 %v418
    %465 = vmatprep.subr.mxu0 0.0
    %466 = vmatpush1.msra.mxu0 %v419
    %467 = vmatprep.subr.mxu0 0.0
    %468 = vmatpush1.msra.mxu0 %v420
    %469 = vmatprep.subr.mxu0 0.0
    %470 = vmatpush1.msra.mxu0 0.0
    %471 = vmatprep.subr.mxu0 0.0
    %472 = vmatpush1.msra.mxu0 0.0
    %473 = vmatprep.subr.mxu0 0.0
    %474 = vmatpush1.msra.mxu0 0.0
    %475 = vmatprep.subr.mxu0 0.0
    %476 = vmatpush1.msra.mxu0 0.0
    %477 = vmatprep.subr.mxu0 0.0
    %478 = vmatpush1.msra.mxu0 0.0
    %479 = vmatprep.subr.mxu0 0.0
    %480 = vmatpush1.msra.mxu0 0.0
    %481 = vmatprep.subr.mxu0 0.0
    %482 = vmatpush1.msra.mxu0 0.0
    %483 = vmatprep.subr.mxu0 0.0
    %484 = vmatpush1.msra.mxu0 0.0
    %485 = vmatprep.subr.mxu0 0.0
    %486 = vmatpush1.msra.mxu0 0.0
    %487 = vmatprep.subr.mxu0 0.0
    %488 = vmatpush1.msra.mxu0 0.0
    %489 = vmatprep.subr.mxu0 0.0
    %490 = vmatpush1.msra.mxu0 0.0
    %491 = vmatprep.subr.mxu0 0.0
    %492 = vmatpush1.msra.mxu0 0.0
    %493 = vmatprep.subr.mxu0 0.0
    %494 = vmatpush1.msra.mxu0 0.0
    %495 = vmatprep.subr.mxu0 0.0
    %496 = vmatpush1.msra.mxu0 0.0
    %497 = vmatprep.subr.mxu0 0.0
    %498 = vmatpush1.msra.mxu0 0.0
    %499 = vmatprep.subr.mxu0 0.0
    %500 = vmatpush1.msra.mxu0 0.0
    %501 = vmatprep.subr.mxu0 0.0
    %502 = vmatpush1.msra.mxu0 0.0
    %503 = vmatprep.subr.mxu0 0.0
    %504 = vmatpush1.msra.mxu0 0.0
    %505 = vmatprep.subr.mxu0 0.0
    %506 = vmatpush1.msra.mxu0 0.0
    %507 = vmatprep.subr.mxu0 0.0
    %508 = vmatpush1.msra.mxu0 0.0
    %509 = vmatprep.subr.mxu0 0.0
    %510 = vmatpush1.msra.mxu0 0.0
    %511 = vmatprep.subr.mxu0 0.0
    %512 = vmatpush1.msra.mxu0 0.0
    %513 = vmatprep.subr.mxu0 0.0
    %514 = vmatpush1.msra.mxu0 0.0
    %515 = vmatprep.subr.mxu0 0.0
    %516 = vmatpush1.msra.mxu0 0.0
    %517 = vmatprep.subr.mxu0 0.0
    %518 = vmatpush1.msra.mxu0 0.0
    %519 = vmatprep.subr.mxu0 0.0
    %520 = vmatpush1.msra.mxu0 0.0
    %521 = vmatprep.subr.mxu0 0.0
    %522 = vmatpush1.msra.mxu0 0.0
    %523 = vmatprep.subr.mxu0 0.0
    %524 = vmatpush1.msra.mxu0 0.0
    %525 = vmatprep.mubr.f32.mxu0 0.0
    %526 = vmatmul.mubr.f32.gmra.mrb[0].mxu0 %v450
    %v527 = vpop.f32.mrb[0].mxu0
    %v528 = vadd.f32 %v432, %v527
    %v529 = vpop.f32.mrb[0].mxu0
    %530 = vmatprep.mubr.f32.mxu0 0.0
    %531 = vmatmul.mubr.f32.gmra.mrb[0].mxu0 %v453
    %v532 = vpop.f32.mrb[0].mxu0
    %v533 = vadd.f32 %v437, %v532
    %v534 = vpop.f32.mrb[0].mxu0
    %535 = vmatprep.mubr.f32.mxu0 0.0
    %536 = vmatmul.mubr.f32.gmra.mrb[0].mxu0 %v456
    %v537 = vpop.f32.mrb[0].mxu0
    %v538 = vadd.f32 %v442, %v537
    %v539 = vpop.f32.mrb[0].mxu0
    %540 = vmatprep.mubr.f32.mxu0 0.0
    %541 = vmatmul.mubr.f32.gmra.mrb[0].mxu0 %v459
    %v542 = vpop.f32.mrb[0].mxu0
    %v543 = vadd.f32 %v447, %v542
    %v544 = vpop.f32.mrb[0].mxu0
    %545 = vdwg.mxu0
    %v546 = vmax.f32 %v528, 0.0
    %v547 = vmax.f32 %v533, 0.0
    %v548 = vmax.f32 %v538, 0.0
    %v549 = vmax.f32 %v543, 0.0
    %v550 = vld [vmem:[%s7] sm:$0xff]
    %v551 = vld [vmem:[%s7 + $0x8] sm:$0xff]
    %v552 = vld [vmem:[%s7 + $0x10] sm:$0xff]
    %v553 = vld [vmem:[%s7 + $0x18] sm:$0xff]
    %v554 = vld [vmem:[%s8] sm:$0xff]
    %v555 = vld [vmem:[%s8 + $0x8] sm:$0xff]
    %v556 = vld [vmem:[%s8 + $0x10] sm:$0xff]
    %v557 = vld [vmem:[%s8 + $0x18] sm:$0xff]
    %559 = vset.pattern.permute.xlu0 0
    %560 = vperm.xlu0 %559, %v554
    %v561 = vpop.permute.xlu0 %560
    %564 = vset.pattern.permute.xlu0 0
    %565 = vperm.xlu0 %564, %v555
    %v566 = vpop.permute.xlu0 %565
    %569 = vset.pattern.permute.xlu0 0
    %570 = vperm.xlu0 %569, %v556
    %v571 = vpop.permute.xlu0 %570
    %574 = vset.pattern.permute.xlu0 0
    %575 = vperm.xlu0 %574, %v557
    %v576 = vpop.permute.xlu0 %575
    %v579 = vsel %vm62, %v550, 0
    %v582 = vsel %vm62, %v551, 0
    %v585 = vsel %vm62, %v552, 0
    %v588 = vsel %vm62, %v553, 0
    %590 = vmatprep.subr.mxu0 0.0
    %591 = vmatpush1.msra.mxu0 %v546
    %592 = vmatprep.subr.mxu0 0.0
    %593 = vmatpush1.msra.mxu0 %v547
    %594 = vmatprep.subr.mxu0 0.0
    %595 = vmatpush1.msra.mxu0 %v548
    %596 = vmatprep.subr.mxu0 0.0
    %597 = vmatpush1.msra.mxu0 %v549
    %598 = vmatprep.subr.mxu0 0.0
    %599 = vmatpush1.msra.mxu0 0.0
    %600 = vmatprep.subr.mxu0 0.0
    %601 = vmatpush1.msra.mxu0 0.0
    %602 = vmatprep.subr.mxu0 0.0
    %603 = vmatpush1.msra.mxu0 0.0
    %604 = vmatprep.subr.mxu0 0.0
    %605 = vmatpush1.msra.mxu0 0.0
    %606 = vmatprep.subr.mxu0 0.0
    %607 = vmatpush1.msra.mxu0 0.0
    %608 = vmatprep.subr.mxu0 0.0
    %609 = vmatpush1.msra.mxu0 0.0
    %610 = vmatprep.subr.mxu0 0.0
    %611 = vmatpush1.msra.mxu0 0.0
    %612 = vmatprep.subr.mxu0 0.0
    %613 = vmatpush1.msra.mxu0 0.0
    %614 = vmatprep.subr.mxu0 0.0
    %615 = vmatpush1.msra.mxu0 0.0
    %616 = vmatprep.subr.mxu0 0.0
    %617 = vmatpush1.msra.mxu0 0.0
    %618 = vmatprep.subr.mxu0 0.0
    %619 = vmatpush1.msra.mxu0 0.0
    %620 = vmatprep.subr.mxu0 0.0
    %621 = vmatpush1.msra.mxu0 0.0
    %622 = vmatprep.subr.mxu0 0.0
    %623 = vmatpush1.msra.mxu0 0.0
    %624 = vmatprep.subr.mxu0 0.0
    %625 = vmatpush1.msra.mxu0 0.0
    %626 = vmatprep.subr.mxu0 0.0
    %627 = vmatpush1.msra.mxu0 0.0
    %628 = vmatprep.subr.mxu0 0.0
    %629 = vmatpush1.msra.mxu0 0.0
    %630 = vmatprep.subr.mxu0 0.0
    %631 = vmatpush1.msra.mxu0 0.0
    %632 = vmatprep.subr.mxu0 0.0
    %633 = vmatpush1.msra.mxu0 0.0
    %634 = vmatprep.subr.mxu0 0.0
    %635 = vmatpush1.msra.mxu0 0.0
    %636 = vmatprep.subr.mxu0 0.0
    %637 = vmatpush1.msra.mxu0 0.0
    %638 = vmatprep.subr.mxu0 0.0
    %639 = vmatpush1.msra.mxu0 0.0
    %640 = vmatprep.subr.mxu0 0.0
    %641 = vmatpush1.msra.mxu0 0.0
    %642 = vmatprep.subr.mxu0 0.0
    %643 = vmatpush1.msra.mxu0 0.0
    %644 = vmatprep.subr.mxu0 0.0
    %645 = vmatpush1.msra.mxu0 0.0
    %646 = vmatprep.subr.mxu0 0.0
    %647 = vmatpush1.msra.mxu0 0.0
    %648 = vmatprep.subr.mxu0 0.0
    %649 = vmatpush1.msra.mxu0 0.0
    %650 = vmatprep.subr.mxu0 0.0
    %651 = vmatpush1.msra.mxu0 0.0
    %652 = vmatprep.subr.mxu0 0.0
    %653 = vmatpush1.msra.mxu0 0.0
    %654 = vmatprep.mubr.f32.mxu0 0.0
    %655 = vmatmul.mubr.f32.gmra.mrb[0].mxu0 %v579
    %v656 = vpop.f32.mrb[0].mxu0
    %v657 = vadd.f32 %v561, %v656
    %v658 = vpop.f32.mrb[0].mxu0
    %659 = vmatprep.mubr.f32.mxu0 0.0
    %660 = vmatmul.mubr.f32.gmra.mrb[0].mxu0 %v582
    %v661 = vpop.f32.mrb[0].mxu0
    %v662 = vadd.f32 %v566, %v661
    %v663 = vpop.f32.mrb[0].mxu0
    %664 = vmatprep.mubr.f32.mxu0 0.0
    %665 = vmatmul.mubr.f32.gmra.mrb[0].mxu0 %v585
    %v666 = vpop.f32.mrb[0].mxu0
    %v667 = vadd.f32 %v571, %v666
    %v668 = vpop.f32.mrb[0].mxu0
    %669 = vmatprep.mubr.f32.mxu0 0.0
    %670 = vmatmul.mubr.f32.gmra.mrb[0].mxu0 %v588
    %v671 = vpop.f32.mrb[0].mxu0
    %v672 = vadd.f32 %v576, %v671
    %v673 = vpop.f32.mrb[0].mxu0
    %674 = vdwg.mxu0
    %v675 = vmax.f32 %v657, 0.0
    %v676 = vmax.f32 %v662, 0.0
    %v677 = vmax.f32 %v667, 0.0
    %v678 = vmax.f32 %v672, 0.0
    %vm679 = vcmask 130048
    %v681 = vsel %vm679, %v675, 0
    %v684 = vsel %vm679, %v676, 0
    %v687 = vsel %vm679, %v677, 0
    %v690 = vsel %vm679, %v678, 0
    %692 = vmatprep.subr.mxu0 0.0
    %693 = vmatpush1.msra.mxu0 %v56
    %694 = vmatprep.subr.mxu0 0.0
    %695 = vmatpush1.msra.mxu0 %v57
    %696 = vmatprep.subr.mxu0 0.0
    %697 = vmatpush1.msra.mxu0 0.0
    %698 = vmatprep.subr.mxu0 0.0
    %699 = vmatpush1.msra.mxu0 0.0
    %700 = vmatprep.subr.mxu0 0.0
    %701 = vmatpush1.msra.mxu0 0.0
    %702 = vmatprep.subr.mxu0 0.0
    %703 = vmatpush1.msra.mxu0 0.0
    %704 = vmatprep.subr.mxu0 0.0
    %705 = vmatpush1.msra.mxu0 0.0
    %706 = vmatprep.subr.mxu0 0.0
    %707 = vmatpush1.msra.mxu0 0.0
    %708 = vmatprep.subr.mxu0 0.0
    %709 = vmatpush1.msra.mxu0 0.0
    %710 = vmatprep.subr.mxu0 0.0
    %711 = vmatpush1.msra.mxu0 0.0
    %712 = vmatprep.subr.mxu0 0.0
    %713 = vmatpush1.msra.mxu0 0.0
    %714 = vmatprep.subr.mxu0 0.0
    %715 = vmatpush1.msra.mxu0 0.0
    %716 = vmatprep.subr.mxu0 0.0
    %717 = vmatpush1.msra.mxu0 0.0
    %718 = vmatprep.subr.mxu0 0.0
    %719 = vmatpush1.msra.mxu0 0.0
    %720 = vmatprep.subr.mxu0 0.0
    %721 = vmatpush1.msra.mxu0 0.0
    %722 = vmatprep.subr.mxu0 0.0
    %723 = vmatpush1.msra.mxu0 0.0
    %724 = vmatprep.subr.mxu0 0.0
    %725 = vmatpush1.msra.mxu0 0.0
    %726 = vmatprep.subr.mxu0 0.0
    %727 = vmatpush1.msra.mxu0 0.0
    %728 = vmatprep.subr.mxu0 0.0
    %729 = vmatpush1.msra.mxu0 0.0
    %730 = vmatprep.subr.mxu0 0.0
    %731 = vmatpush1.msra.mxu0 0.0
    %732 = vmatprep.subr.mxu0 0.0
    %733 = vmatpush1.msra.mxu0 0.0
    %734 = vmatprep.subr.mxu0 0.0
    %735 = vmatpush1.msra.mxu0 0.0
    %736 = vmatprep.subr.mxu0 0.0
    %737 = vmatpush1.msra.mxu0 0.0
    %738 = vmatprep.subr.mxu0 0.0
    %739 = vmatpush1.msra.mxu0 0.0
    %740 = vmatprep.subr.mxu0 0.0
    %741 = vmatpush1.msra.mxu0 0.0
    %742 = vmatprep.subr.mxu0 0.0
    %743 = vmatpush1.msra.mxu0 0.0
    %744 = vmatprep.subr.mxu0 0.0
    %745 = vmatpush1.msra.mxu0 0.0
    %746 = vmatprep.subr.mxu0 0.0
    %747 = vmatpush1.msra.mxu0 0.0
    %748 = vmatprep.subr.mxu0 0.0
    %749 = vmatpush1.msra.mxu0 0.0
    %750 = vmatprep.subr.mxu0 0.0
    %751 = vmatpush1.msra.mxu0 0.0
    %752 = vmatprep.subr.mxu0 0.0
    %753 = vmatpush1.msra.mxu0 0.0
    %754 = vmatprep.subr.mxu0 0.0
    %755 = vmatpush1.msra.mxu0 0.0
    %756 = vmatprep.mubr.f32.mxu0 0.0
    %757 = vmatmul.mubr.f32.gmra.mrb[0].mxu0 %v681
    %v758 = vpop.f32.mrb[0].mxu0
    %v759 = vadd.f32 0.0, %v758
    %v760 = vpop.f32.mrb[0].mxu0
    %761 = vmatprep.mubr.f32.mxu0 0.0
    %762 = vmatmul.mubr.f32.gmra.mrb[0].mxu0 %v684
    %v763 = vpop.f32.mrb[0].mxu0
    %v764 = vadd.f32 0.0, %v763
    %v765 = vpop.f32.mrb[0].mxu0
    %766 = vmatprep.mubr.f32.mxu0 0.0
    %767 = vmatmul.mubr.f32.gmra.mrb[0].mxu0 %v687
    %v768 = vpop.f32.mrb[0].mxu0
    %v769 = vadd.f32 0.0, %v768
    %v770 = vpop.f32.mrb[0].mxu0
    %771 = vmatprep.mubr.f32.mxu0 0.0
    %772 = vmatmul.mubr.f32.gmra.mrb[0].mxu0 %v690
    %v773 = vpop.f32.mrb[0].mxu0
    %v774 = vadd.f32 0.0, %v773
    %v775 = vpop.f32.mrb[0].mxu0
    %776 = vdwg.mxu0
    %v777 = vadd.f32 %v36, %v759
    %v778 = vadd.f32 %v37, %v764
    %v779 = vadd.f32 %v38, %v769
    %v780 = vadd.f32 %v39, %v774
    %v781 = vtanh.pop %v777
    %v782 = vtanh.pop %v778
    %v783 = vtanh.pop %v779
    %v784 = vtanh.pop %v780
    %v785 = vld [vmem:[%s9] sm:$0x1]
    %v787 = vsel %vm62, %v785, 0
    %789 = vmatprep.subr.mxu0 0.0
    %790 = vmatpush1.msra.mxu0 %v781
    %791 = vmatprep.subr.mxu0 0.0
    %792 = vmatpush1.msra.mxu0 %v782
    %793 = vmatprep.subr.mxu0 0.0
    %794 = vmatpush1.msra.mxu0 %v783
    %795 = vmatprep.subr.mxu0 0.0
    %796 = vmatpush1.msra.mxu0 %v784
    %797 = vmatprep.subr.mxu0 0.0
    %798 = vmatpush1.msra.mxu0 0.0
    %799 = vmatprep.subr.mxu0 0.0
    %800 = vmatpush1.msra.mxu0 0.0
    %801 = vmatprep.subr.mxu0 0.0
    %802 = vmatpush1.msra.mxu0 0.0
    %803 = vmatprep.subr.mxu0 0.0
    %804 = vmatpush1.msra.mxu0 0.0
    %805 = vmatprep.subr.mxu0 0.0
    %806 = vmatpush1.msra.mxu0 0.0
    %807 = vmatprep.subr.mxu0 0.0
    %808 = vmatpush1.msra.mxu0 0.0
    %809 = vmatprep.subr.mxu0 0.0
    %810 = vmatpush1.msra.mxu0 0.0
    %811 = vmatprep.subr.mxu0 0.0
    %812 = vmatpush1.msra.mxu0 0.0
    %813 = vmatprep.subr.mxu0 0.0
    %814 = vmatpush1.msra.mxu0 0.0
    %815 = vmatprep.subr.mxu0 0.0
    %816 = vmatpush1.msra.mxu0 0.0
    %817 = vmatprep.subr.mxu0 0.0
    %818 = vmatpush1.msra.mxu0 0.0
    %819 = vmatprep.subr.mxu0 0.0
    %820 = vmatpush1.msra.mxu0 0.0
    %821 = vmatprep.subr.mxu0 0.0
    %822 = vmatpush1.msra.mxu0 0.0
    %823 = vmatprep.subr.mxu0 0.0
    %824 = vmatpush1.msra.mxu0 0.0
    %825 = vmatprep.subr.mxu0 0.0
    %826 = vmatpush1.msra.mxu0 0.0
    %827 = vmatprep.subr.mxu0 0.0
    %828 = vmatpush1.msra.mxu0 0.0
    %829 = vmatprep.subr.mxu0 0.0
    %830 = vmatpush1.msra.mxu0 0.0
    %831 = vmatprep.subr.mxu0 0.0
    %832 = vmatpush1.msra.mxu0 0.0
    %833 = vmatprep.subr.mxu0 0.0
    %834 = vmatpush1.msra.mxu0 0.0
    %835 = vmatprep.subr.mxu0 0.0
    %836 = vmatpush1.msra.mxu0 0.0
    %837 = vmatprep.subr.mxu0 0.0
    %838 = vmatpush1.msra.mxu0 0.0
    %839 = vmatprep.subr.mxu0 0.0
    %840 = vmatpush1.msra.mxu0 0.0
    %841 = vmatprep.subr.mxu0 0.0
    %842 = vmatpush1.msra.mxu0 0.0
    %843 = vmatprep.subr.mxu0 0.0
    %844 = vmatpush1.msra.mxu0 0.0
    %845 = vmatprep.subr.mxu0 0.0
    %846 = vmatpush1.msra.mxu0 0.0
    %847 = vmatprep.subr.mxu0 0.0
    %848 = vmatpush1.msra.mxu0 0.0
    %849 = vmatprep.subr.mxu0 0.0
    %850 = vmatpush1.msra.mxu0 0.0
    %851 = vmatprep.subr.mxu0 0.0
    %852 = vmatpush1.msra.mxu0 0.0
    %853 = vmatprep.mubr.f32.mxu0 0.0
    %854 = vmatmul.mubr.f32.gmra.mrb[0].mxu0 %v787
    %v855 = vpop.f32.mrb[0].mxu0
    %v856 = vadd.f32 0.0, %v855
    %v857 = vpop.f32.mrb[0].mxu0
    %858 = vdwg.mxu0
    %859 = vst [vmem:[#allocation2] sm:$0x1] %v856
    // Predicated region
    $region42: #{tpu_custom_call.1} parent=1 // pred_check
      _
    $region43: #{tpu_custom_call.1} parent=1 // pred_check_branch
      %861 = sbr.rel (0) target = $region45
    $region44: #{tpu_custom_call.1} parent=1 // pred_region
      %s863 = ssub.s32 16, 16
      %864 = vsyncadd [#allocation3], %s863
      %s866 = sshll.u32 [#allocation2], 4
      %s867 = int_to_ptr.vmem [resolvable:$true] %s866
      %869 = dma.vmem_to_hbm [thread:$0]  %s867, 16, %s10, [#allocation3]
    $region45: #{tpu_custom_call.1} parent=1 // pred_fallthru
      _
    // Predicated region
    $region46: #{tpu_custom_call.1} parent=1 // pred_check
      _
    $region47: #{tpu_custom_call.1} parent=1 // pred_check_branch
      %871 = sbr.rel (0) target = $region49
    $region48: #{tpu_custom_call.1} parent=1 // pred_region
      %872 = dma.done [#allocation3], 16
    $region49: #{tpu_custom_call.1} parent=1 // pred_fallthru
      _
    %873 = vsyncpa [#allocation3], 1

</llo_original>
